<compile_context>
chip_gen: v6e
topology: v6e:2x2x1
jax: 0.10.0
libtpu: 0.0.40
codegen_flags: <defaults>
</compile_context>

<pallas_src>
import math

import jax
import jax.numpy as jnp
from jax import lax
from jax.experimental import pallas as pl
from jax.experimental.pallas import tpu as pltpu


# ----------------------------- in-kernel helpers -----------------------------

def _layernorm(x, gamma, beta, eps=1e-5):
    mu = jnp.mean(x, axis=-1, keepdims=True)
    c = x - mu
    var = jnp.mean(c * c, axis=-1, keepdims=True)
    return c * lax.rsqrt(var + eps) * gamma + beta


def _wdot(a_f32, w_bf16):
    # bf16 MXU path: cast the activation, keep f32 accumulation.
    return jnp.dot(a_f32.astype(jnp.bfloat16), w_bf16,
                   preferred_element_type=jnp.float32)


# ------------------------------- fused kernel -------------------------------
# Weight layout per layer (leading grid axis = layer, 0 = enc, 1..3 = dec):
#   w_ref : (5, F, F) bf16  rows = [w_proj_x, w_proj_y, w_graph, w_lin1, w_lin2]
#   p_ref : (9, F)    f32   rows = [b_px, b_py, b_g, b_1, b_2,
#                                   gamma_a, beta_a, gamma_b, beta_b]
# For the encoder: proj_y == proj (so yq == xv and the symmetric-A identity
# A^T x == A x reproduces BaseLayer), norm_a = norm1, norm_b = norm2.
# For decoders: norm_a = norm3, norm_b unused (identity params, selected away).

def graph_ed_kernel(x_ref, w_ref, p_ref, out_ref, acc_ref):
    l = pl.program_id(0)              # layer: 0 = encoder, 1..3 = decoders
    b = pl.program_id(1)              # graph (relation set) index
    is_enc = l == 0

    # Stage 0 seeds the carried activation with the input relation features.
    @pl.when(is_enc)
    def _():
        acc_ref[b] = x_ref[...]

    src = acc_ref[b]                                           # (N, F) f32

    bpx, bpy = p_ref[0], p_ref[1]
    bg, b1, b2 = p_ref[2], p_ref[3], p_ref[4]
    g_a, be_a = p_ref[5], p_ref[6]
    g_b, be_b = p_ref[7], p_ref[8]

    # ---- BaseQVLayer (graph attention) ----
    xv = _wdot(src, w_ref[0]) + bpx                            # projection(value)
    yq = _wdot(src, w_ref[1]) + bpy                            # projection_y(query)

    # A_ = xv @ yq^T without materializing a transpose (NT contraction), f32.
    A_ = lax.dot_general(xv, yq, (((1,), (1,)), ((), ())),
                         preferred_element_type=jnp.float32)   # (Nv, Nq)
    dx = jnp.sum(xv * xv, axis=-1, keepdims=True)              # ||xv_i||^2
    dy = jnp.sum(yq * yq, axis=-1, keepdims=True)              # ||yq_j||^2
    # Exact f32 divide; 0/0 -> nan matches the reference module's behavior.
    A = (2.0 * A_) / (dx + dy.T)

    # gwf = A^T @ xv without a transpose (TN contraction), f32.
    gwf = lax.dot_general(A, xv, (((0,), (0,)), ((), ())),
                          preferred_element_type=jnp.float32)  # (Nq, F)
    s2 = jnp.maximum(_wdot(gwf, w_ref[2]) + bg, 0.0)           # graph_feats + ReLU

    # ---- residual + norm + FFN (dropouts are identity in eval) ----
    t = _layernorm(src + s2, g_a, be_a)
    h = jnp.maximum(_wdot(t, w_ref[3]) + b1, 0.0)
    t2 = t + _wdot(h, w_ref[4]) + b2
    # Encoder has a second LayerNorm at the end; decoders do not.
    out = jnp.where(is_enc, _layernorm(t2, g_b, be_b), t2)

    acc_ref[b] = out
    out_ref[...] = out


# ------------------------------- wrappers -------------------------------

def prepare_params(params):
    """One-time weight packing (hoisted out of the hot path; call once).

    Returns a pytree with
      w: (4, 5, F, F) bf16  stacked weight matrices per layer
      p: (4, 9, F)    f32   stacked biases + LayerNorm params per layer
    """
    enc = params["enc"]
    decs = [params["dec1"], params["dec2"], params["dec3"]]
    F = enc["wp"].shape[0]
    ones = jnp.ones((F,), jnp.float32)
    zeros = jnp.zeros((F,), jnp.float32)
    row = lambda v: jnp.reshape(v, (F,)).astype(jnp.float32)

    # Encoder as a QV layer with projection_y := projection (A symmetric).
    w_layers = [[enc["wp"], enc["wp"], enc["wg"], enc["w1"], enc["w2"]]]
    p_layers = [[row(enc["bp"]), row(enc["bp"]), row(enc["bg"]), row(enc["b1"]),
                 row(enc["b2"]), row(enc["g1"]), row(enc["be1"]),
                 row(enc["g2"]), row(enc["be2"])]]
    for d in decs:
        w_layers.append([d["wpx"], d["wpy"], d["wg"], d["w1"], d["w2"]])
        p_layers.append([row(d["bpx"]), row(d["bpy"]), row(d["bg"]), row(d["b1"]),
                         row(d["b2"]), row(d["g3"]), row(d["be3"]), ones, zeros])

    w_all = jnp.stack([jnp.stack(ws) for ws in w_layers]).astype(jnp.bfloat16)
    p_all = jnp.stack([jnp.stack(ps) for ps in p_layers]).astype(jnp.float32)
    return dict(w=w_all, p=p_all)


@jax.jit
def graph_ed_forward(x, fused):
    """x: (B, N, F) batch of B independent relation sets; fused from prepare_params."""
    B, N, F = x.shape
    w_all, p_all = fused["w"], fused["p"]
    L = w_all.shape[0]                      # 4 = enc + 3 dec

    return pl.pallas_call(
        graph_ed_kernel,
        out_shape=jax.ShapeDtypeStruct((B, N, F), jnp.float32),
        grid_spec=pltpu.PrefetchScalarGridSpec(
            num_scalar_prefetch=0,
            # Layer axis outermost so each layer's weights are DMA'd once and
            # reused by every graph in the batch; graph axis innermost.
            grid=(L, B),
            in_specs=[
                pl.BlockSpec((None, N, F), lambda l, b: (b, 0, 0)),        # x
                pl.BlockSpec((None, 5, F, F), lambda l, b: (l, 0, 0, 0)),  # weights
                pl.BlockSpec((None, 9, F), lambda l, b: (l, 0, 0)),        # bias/LN
            ],
            out_specs=pl.BlockSpec((None, N, F), lambda l, b: (b, 0, 0)),
            scratch_shapes=[pltpu.VMEM((B, N, F), jnp.float32)],  # carried acts
        ),
        compiler_params=pltpu.CompilerParams(
            # Both axes sequential ("arbitrary") for portability; on v7x the
            # batch axis could be promoted to a leading PARALLEL axis for
            # megacore once the kernel is no longer HBM-bound.
            dimension_semantics=("arbitrary", "arbitrary"),
            vmem_limit_bytes=64 * 1024 * 1024,
        ),
    )(x, w_all, p_all)


# ------------------- pure-JAX reference (bf16-weight numerics) -------------------

def _ln_ref(x, g, b, eps=1e-5):
    mu = jnp.mean(x, -1, keepdims=True)
    var = jnp.mean((x - mu) ** 2, -1, keepdims=True)
    return (x - mu) * lax.rsqrt(var + eps) * g + b


def _bf16_linear_ref(x, w, b):
    return jnp.dot(x.astype(jnp.bfloat16), w.astype(jnp.bfloat16),
                   preferred_element_type=jnp.float32) + b


_HI = lax.Precision.HIGHEST


def enc_layer_ref(src, p):
    x = _bf16_linear_ref(src, p["wp"], p["bp"])
    A_ = jnp.dot(x, x.T, precision=_HI)
    d = jnp.sum(x * x, -1, keepdims=True)
    A = 2.0 * A_ / (d + d.T)
    src2 = jnp.maximum(
        _bf16_linear_ref(jnp.dot(A, x, precision=_HI), p["wg"], p["bg"]), 0.0)
    t = _ln_ref(src + src2, p["g1"], p["be1"])
    h = jnp.maximum(_bf16_linear_ref(t, p["w1"], p["b1"]), 0.0)
    t2 = _bf16_linear_ref(h, p["w2"], p["b2"])
    return _ln_ref(t + t2, p["g2"], p["be2"])


def dec_layer_ref(q, v, p):
    x = _bf16_linear_ref(v, p["wpx"], p["bpx"])
    y = _bf16_linear_ref(q, p["wpy"], p["bpy"])
    A_ = jnp.dot(x, y.T, precision=_HI)
    dx = jnp.sum(x * x, -1, keepdims=True)
    dy = jnp.sum(y * y, -1, keepdims=True)
    A = 2.0 * A_ / (dx + dy.T)
    tgt2 = jnp.maximum(
        _bf16_linear_ref(jnp.dot(A.T, x, precision=_HI), p["wg"], p["bg"]), 0.0)
    tgt = _ln_ref(q + tgt2, p["g3"], p["be3"])
    h = jnp.maximum(_bf16_linear_ref(tgt, p["w1"], p["b1"]), 0.0)
    return tgt + _bf16_linear_ref(h, p["w2"], p["b2"])


def graph_ed_forward_ref(x, params):
    outs = []
    for b in range(x.shape[0]):
        out = enc_layer_ref(x[b], params["enc"])
        out = dec_layer_ref(out, out, params["dec1"])
        out = dec_layer_ref(out, out, params["dec2"])
        out = dec_layer_ref(out, out, params["dec3"])
        outs.append(out)
    return jnp.stack(outs)


# ------------------------------- parameter init -------------------------------

def _init_linear(key, fan_in, fan_out):
    kw, kb = jax.random.split(key)
    bound = 1.0 / math.sqrt(fan_in)
    w = jax.random.uniform(kw, (fan_in, fan_out), jnp.float32, -bound, bound)
    b = jax.random.uniform(kb, (1, fan_out), jnp.float32, -bound, bound)
    return w, b


def init_params(key, fsize):
    k_enc, k_d1, k_d2, k_d3 = jax.random.split(key, 4)
    ones = jnp.ones((1, fsize), jnp.float32)
    zeros = jnp.zeros((1, fsize), jnp.float32)

    def enc_params(k):
        ks = jax.random.split(k, 4)
        wp, bp = _init_linear(ks[0], fsize, fsize)   # BaseLayer.projection
        wg, bg = _init_linear(ks[1], fsize, fsize)   # BaseLayer.graph_feats
        w1, b1 = _init_linear(ks[2], fsize, fsize)   # EncLayer.linear1
        w2, b2 = _init_linear(ks[3], fsize, fsize)   # EncLayer.linear2
        return dict(wp=wp, bp=bp, wg=wg, bg=bg, w1=w1, b1=b1, w2=w2, b2=b2,
                    g1=ones, be1=zeros, g2=ones, be2=zeros)

    def dec_params(k):
        ks = jax.random.split(k, 5)
        wpx, bpx = _init_linear(ks[0], fsize, fsize)  # BaseQVLayer.projection
        wpy, bpy = _init_linear(ks[1], fsize, fsize)  # BaseQVLayer.projection_y
        wg, bg = _init_linear(ks[2], fsize, fsize)    # BaseQVLayer.graph_feats
        w1, b1 = _init_linear(ks[3], fsize, fsize)    # DecLayer.linear1
        w2, b2 = _init_linear(ks[4], fsize, fsize)    # DecLayer.linear2
        return dict(wpx=wpx, bpx=bpx, wpy=wpy, bpy=bpy, wg=wg, bg=bg,
                    w1=w1, b1=b1, w2=w2, b2=b2, g3=ones, be3=zeros)

    return dict(enc=enc_params(k_enc), dec1=dec_params(k_d1),
                dec2=dec_params(k_d2), dec3=dec_params(k_d3))


# ------------------------------------ main ------------------------------------

if __name__ == "__main__":
    key = jax.random.PRNGKey(0)
    # B independent relation sets of N relations x fsize features.  fsize=128
    # keeps the feature dim lane-dense; module default is 1936 (pad to 2048
    # for production use — see TODO at the top of the file).
    B, N, FSIZE = 2, 8, 128

    k_x, k_p = jax.random.split(key)
    x = jax.random.normal(k_x, (B, N, FSIZE), jnp.float32)
    params = init_params(k_p, FSIZE)
    fused = prepare_params(params)          # one-time packing, outside the hot path

    out = jax.block_until_ready(graph_ed_forward(x, fused))
    ref = graph_ed_forward_ref(x, params)   # same bf16-weight / f32-accum policy

    assert out.shape == (B, N, FSIZE)
    assert bool(jnp.all(jnp.isfinite(out)))
    # Tolerance accounts for bf16 activation-rounding differences between the
    # in-kernel MXU path and the XLA reference (both accumulate in f32).
    assert bool(jnp.allclose(out, ref, rtol=2e-2, atol=2e-2)), \
        float(jnp.max(jnp.abs(out - ref)))

    print("KERNEL_OK")
</pallas_src>

<mosaic_0001>
module attributes {stable_mosaic.version = 11 : i64} {
  func.func @graph_ed_kernel(%arg0: i32, %arg1: i32, %arg2: memref<1x8x128xf32, #tpu.memory_space<vmem>>, %arg3: memref<1x5x128x128xbf16, #tpu.memory_space<vmem>>, %arg4: memref<1x9x128xf32, #tpu.memory_space<vmem>>, %arg5: memref<1x8x128xf32, #tpu.memory_space<vmem>>, %arg6: memref<2x8x128xf32, #tpu.memory_space<vmem>>) attributes {dimension_semantics = [#tpu.dimension_semantics<arbitrary>, #tpu.dimension_semantics<arbitrary>], iteration_bounds = array<i64: 4, 2>, scalar_prefetch = 0 : i64, scratch_operands = 1 : i64, tpu.core_type = #tpu.core_type<tc>, window_params = [{transform_indices = @transform_0, window_bounds = array<i64: 1, 8, 128>}, {transform_indices = @transform_1, window_bounds = array<i64: 1, 5, 128, 128>}, {transform_indices = @transform_2, window_bounds = array<i64: 1, 9, 128>}, {transform_indices = @transform_3, window_bounds = array<i64: 1, 8, 128>}]} {
    %c0_i32 = arith.constant 0 : i32
    %0 = arith.cmpi eq, %arg0, %c0_i32 : i32
    %1 = arith.extui %0 : i1 to i32
    %c0_i32_0 = arith.constant 0 : i32
    %2 = arith.cmpi ne, %1, %c0_i32_0 : i32
    scf.if %2 {
      %c0_67 = arith.constant 0 : index
      %c0_68 = arith.constant 0 : index
      %c0_69 = arith.constant 0 : index
      %132 = vector.load %arg2[%c0_67, %c0_68, %c0_69] : memref<1x8x128xf32, #tpu.memory_space<vmem>>, vector<1x8x128xf32>
      %133 = vector.shape_cast %132 : vector<1x8x128xf32> to vector<8x128xf32>
      %134 = arith.index_cast %arg1 : i32 to index
      %c0_70 = arith.constant 0 : index
      %c0_71 = arith.constant 0 : index
      %135 = vector.load %arg6[%134, %c0_70, %c0_71] : memref<2x8x128xf32, #tpu.memory_space<vmem>>, vector<1x8x128xf32>
      %136 = vector.shape_cast %135 : vector<1x8x128xf32> to vector<8x128xf32>
      %137 = vector.shape_cast %133 : vector<8x128xf32> to vector<1x8x128xf32>
      tpu.vector_store %arg6[%134, %c0_70, %c0_71], %137 {strides = array<i32>} : memref<2x8x128xf32, #tpu.memory_space<vmem>>, vector<1x8x128xf32>,
    } else {
    }
    %3 = arith.index_cast %arg1 : i32 to index
    %c0 = arith.constant 0 : index
    %c0_1 = arith.constant 0 : index
    %4 = vector.load %arg6[%3, %c0, %c0_1] : memref<2x8x128xf32, #tpu.memory_space<vmem>>, vector<1x8x128xf32>
    %5 = vector.shape_cast %4 : vector<1x8x128xf32> to vector<8x128xf32>
    %c0_2 = arith.constant 0 : index
    %c0_3 = arith.constant 0 : index
    %c0_4 = arith.constant 0 : index
    %6 = vector.load %arg4[%c0_2, %c0_3, %c0_4] : memref<1x9x128xf32, #tpu.memory_space<vmem>>, vector<1x1x128xf32>
    %7 = vector.shape_cast %6 : vector<1x1x128xf32> to vector<128xf32>
    %c0_5 = arith.constant 0 : index
    %c1 = arith.constant 1 : index
    %c0_6 = arith.constant 0 : index
    %8 = vector.load %arg4[%c0_5, %c1, %c0_6] : memref<1x9x128xf32, #tpu.memory_space<vmem>>, vector<1x1x128xf32>
    %9 = vector.shape_cast %8 : vector<1x1x128xf32> to vector<128xf32>
    %c0_7 = arith.constant 0 : index
    %c2 = arith.constant 2 : index
    %c0_8 = arith.constant 0 : index
    %10 = vector.load %arg4[%c0_7, %c2, %c0_8] : memref<1x9x128xf32, #tpu.memory_space<vmem>>, vector<1x1x128xf32>
    %11 = vector.shape_cast %10 : vector<1x1x128xf32> to vector<128xf32>
    %c0_9 = arith.constant 0 : index
    %c3 = arith.constant 3 : index
    %c0_10 = arith.constant 0 : index
    %12 = vector.load %arg4[%c0_9, %c3, %c0_10] : memref<1x9x128xf32, #tpu.memory_space<vmem>>, vector<1x1x128xf32>
    %13 = vector.shape_cast %12 : vector<1x1x128xf32> to vector<128xf32>
    %c0_11 = arith.constant 0 : index
    %c4 = arith.constant 4 : index
    %c0_12 = arith.constant 0 : index
    %14 = vector.load %arg4[%c0_11, %c4, %c0_12] : memref<1x9x128xf32, #tpu.memory_space<vmem>>, vector<1x1x128xf32>
    %15 = vector.shape_cast %14 : vector<1x1x128xf32> to vector<128xf32>
    %c0_13 = arith.constant 0 : index
    %c5 = arith.constant 5 : index
    %c0_14 = arith.constant 0 : index
    %16 = vector.load %arg4[%c0_13, %c5, %c0_14] : memref<1x9x128xf32, #tpu.memory_space<vmem>>, vector<1x1x128xf32>
    %17 = vector.shape_cast %16 : vector<1x1x128xf32> to vector<128xf32>
    %c0_15 = arith.constant 0 : index
    %c6 = arith.constant 6 : index
    %c0_16 = arith.constant 0 : index
    %18 = vector.load %arg4[%c0_15, %c6, %c0_16] : memref<1x9x128xf32, #tpu.memory_space<vmem>>, vector<1x1x128xf32>
    %19 = vector.shape_cast %18 : vector<1x1x128xf32> to vector<128xf32>
    %c0_17 = arith.constant 0 : index
    %c7 = arith.constant 7 : index
    %c0_18 = arith.constant 0 : index
    %20 = vector.load %arg4[%c0_17, %c7, %c0_18] : memref<1x9x128xf32, #tpu.memory_space<vmem>>, vector<1x1x128xf32>
    %21 = vector.shape_cast %20 : vector<1x1x128xf32> to vector<128xf32>
    %c0_19 = arith.constant 0 : index
    %c8 = arith.constant 8 : index
    %c0_20 = arith.constant 0 : index
    %22 = vector.load %arg4[%c0_19, %c8, %c0_20] : memref<1x9x128xf32, #tpu.memory_space<vmem>>, vector<1x1x128xf32>
    %23 = vector.shape_cast %22 : vector<1x1x128xf32> to vector<128xf32>
    %c0_21 = arith.constant 0 : index
    %c0_22 = arith.constant 0 : index
    %c0_23 = arith.constant 0 : index
    %c0_24 = arith.constant 0 : index
    %24 = vector.load %arg3[%c0_21, %c0_22, %c0_23, %c0_24] : memref<1x5x128x128xbf16, #tpu.memory_space<vmem>>, vector<1x1x128x128xbf16>
    %25 = vector.shape_cast %24 : vector<1x1x128x128xbf16> to vector<128x128xbf16>
    %26 = arith.truncf %5 : vector<8x128xf32> to vector<8x128xbf16>
    %cst = arith.constant dense<0.000000e+00> : vector<8x128xf32>
    %27 = tpu.matmul %26, %25, %cst {dimension_numbers = #tpu.dot_dimension_numbers<[1], [0], [0], [1], [0, 0, 1, 1], [], []>} : vector<8x128xbf16>, vector<128x128xbf16>, vector<8x128xf32> -> vector<8x128xf32>
    %28 = vector.shape_cast %7 : vector<128xf32> to vector<1x128xf32>
    %29 = vector.broadcast %28 : vector<1x128xf32> to vector<8x128xf32>
    %30 = arith.addf %27, %29 : vector<8x128xf32>
    %c0_25 = arith.constant 0 : index
    %c1_26 = arith.constant 1 : index
    %c0_27 = arith.constant 0 : index
    %c0_28 = arith.constant 0 : index
    %31 = vector.load %arg3[%c0_25, %c1_26, %c0_27, %c0_28] : memref<1x5x128x128xbf16, #tpu.memory_space<vmem>>, vector<1x1x128x128xbf16>
    %32 = vector.shape_cast %31 : vector<1x1x128x128xbf16> to vector<128x128xbf16>
    %33 = arith.truncf %5 : vector<8x128xf32> to vector<8x128xbf16>
    %cst_29 = arith.constant dense<0.000000e+00> : vector<8x128xf32>
    %34 = tpu.matmul %33, %32, %cst_29 {dimension_numbers = #tpu.dot_dimension_numbers<[1], [0], [0], [1], [0, 0, 1, 1], [], []>} : vector<8x128xbf16>, vector<128x128xbf16>, vector<8x128xf32> -> vector<8x128xf32>
    %35 = vector.shape_cast %9 : vector<128xf32> to vector<1x128xf32>
    %36 = vector.broadcast %35 : vector<1x128xf32> to vector<8x128xf32>
    %37 = arith.addf %34, %36 : vector<8x128xf32>
    %cst_30 = arith.constant dense<0.000000e+00> : vector<8x8xf32>
    %38 = tpu.matmul %30, %37, %cst_30 {dimension_numbers = #tpu.dot_dimension_numbers<[1], [1], [0], [0], [0, 0, 1, 0], [], []>} : vector<8x128xf32>, vector<8x128xf32>, vector<8x8xf32> -> vector<8x8xf32>
    %39 = arith.mulf %30, %30 : vector<8x128xf32>
    %cst_31 = arith.constant dense<0.000000e+00> : vector<8xf32>
    %40 = vector.multi_reduction <add>, %39, %cst_31 [1] : vector<8x128xf32> to vector<8xf32>
    %41 = vector.shape_cast %40 : vector<8xf32> to vector<8x1xf32>
    %42 = arith.mulf %37, %37 : vector<8x128xf32>
    %cst_32 = arith.constant dense<0.000000e+00> : vector<8xf32>
    %43 = vector.multi_reduction <add>, %42, %cst_32 [1] : vector<8x128xf32> to vector<8xf32>
    %44 = vector.shape_cast %43 : vector<8xf32> to vector<8x1xf32>
    %cst_33 = arith.constant 2.000000e+00 : f32
    %45 = vector.broadcast %cst_33 : f32 to vector<8x8xf32>
    %46 = arith.mulf %45, %38 : vector<8x8xf32>
    %47 = tpu.transpose %44, [1, 0] : vector<8x1xf32> -> vector<1x8xf32>
    %48 = vector.broadcast %41 : vector<8x1xf32> to vector<8x8xf32>
    %49 = vector.broadcast %47 : vector<1x8xf32> to vector<8x8xf32>
    %50 = arith.addf %48, %49 : vector<8x8xf32>
    %51 = arith.divf %46, %50 : vector<8x8xf32>
    %cst_34 = arith.constant dense<0.000000e+00> : vector<8x128xf32>
    %52 = tpu.matmul %51, %30, %cst_34 {dimension_numbers = #tpu.dot_dimension_numbers<[0], [0], [1], [1], [0, 1, 1, 1], [], []>} : vector<8x8xf32>, vector<8x128xf32>, vector<8x128xf32> -> vector<8x128xf32>
    %c0_35 = arith.constant 0 : index
    %c2_36 = arith.constant 2 : index
    %c0_37 = arith.constant 0 : index
    %c0_38 = arith.constant 0 : index
    %53 = vector.load %arg3[%c0_35, %c2_36, %c0_37, %c0_38] : memref<1x5x128x128xbf16, #tpu.memory_space<vmem>>, vector<1x1x128x128xbf16>
    %54 = vector.shape_cast %53 : vector<1x1x128x128xbf16> to vector<128x128xbf16>
    %55 = arith.truncf %52 : vector<8x128xf32> to vector<8x128xbf16>
    %cst_39 = arith.constant dense<0.000000e+00> : vector<8x128xf32>
    %56 = tpu.matmul %55, %54, %cst_39 {dimension_numbers = #tpu.dot_dimension_numbers<[1], [0], [0], [1], [0, 0, 1, 1], [], []>} : vector<8x128xbf16>, vector<128x128xbf16>, vector<8x128xf32> -> vector<8x128xf32>
    %57 = vector.shape_cast %11 : vector<128xf32> to vector<1x128xf32>
    %58 = vector.broadcast %57 : vector<1x128xf32> to vector<8x128xf32>
    %59 = arith.addf %56, %58 : vector<8x128xf32>
    %cst_40 = arith.constant 0.000000e+00 : f32
    %60 = vector.broadcast %cst_40 : f32 to vector<8x128xf32>
    %61 = arith.maximumf %59, %60 : vector<8x128xf32>
    %62 = arith.addf %5, %61 : vector<8x128xf32>
    %cst_41 = arith.constant dense<0.000000e+00> : vector<8xf32>
    %63 = vector.multi_reduction <add>, %62, %cst_41 [1] : vector<8x128xf32> to vector<8xf32>
    %64 = vector.shape_cast %63 : vector<8xf32> to vector<8x1xf32>
    %cst_42 = arith.constant 1.280000e+02 : f32
    %65 = vector.broadcast %cst_42 : f32 to vector<8x1xf32>
    %66 = arith.divf %64, %65 : vector<8x1xf32>
    %67 = vector.broadcast %66 : vector<8x1xf32> to vector<8x128xf32>
    %68 = arith.subf %62, %67 : vector<8x128xf32>
    %69 = arith.mulf %68, %68 : vector<8x128xf32>
    %cst_43 = arith.constant dense<0.000000e+00> : vector<8xf32>
    %70 = vector.multi_reduction <add>, %69, %cst_43 [1] : vector<8x128xf32> to vector<8xf32>
    %71 = vector.shape_cast %70 : vector<8xf32> to vector<8x1xf32>
    %cst_44 = arith.constant 1.280000e+02 : f32
    %72 = vector.broadcast %cst_44 : f32 to vector<8x1xf32>
    %73 = arith.divf %71, %72 : vector<8x1xf32>
    %cst_45 = arith.constant 9.99999974E-6 : f32
    %74 = vector.broadcast %cst_45 : f32 to vector<8x1xf32>
    %75 = arith.addf %73, %74 : vector<8x1xf32>
    %76 = math.rsqrt %75 : vector<8x1xf32>
    %77 = vector.broadcast %76 : vector<8x1xf32> to vector<8x128xf32>
    %78 = arith.mulf %68, %77 : vector<8x128xf32>
    %79 = vector.shape_cast %17 : vector<128xf32> to vector<1x128xf32>
    %80 = vector.broadcast %79 : vector<1x128xf32> to vector<8x128xf32>
    %81 = arith.mulf %78, %80 : vector<8x128xf32>
    %82 = vector.shape_cast %19 : vector<128xf32> to vector<1x128xf32>
    %83 = vector.broadcast %82 : vector<1x128xf32> to vector<8x128xf32>
    %84 = arith.addf %81, %83 : vector<8x128xf32>
    %c0_46 = arith.constant 0 : index
    %c3_47 = arith.constant 3 : index
    %c0_48 = arith.constant 0 : index
    %c0_49 = arith.constant 0 : index
    %85 = vector.load %arg3[%c0_46, %c3_47, %c0_48, %c0_49] : memref<1x5x128x128xbf16, #tpu.memory_space<vmem>>, vector<1x1x128x128xbf16>
    %86 = vector.shape_cast %85 : vector<1x1x128x128xbf16> to vector<128x128xbf16>
    %87 = arith.truncf %84 : vector<8x128xf32> to vector<8x128xbf16>
    %cst_50 = arith.constant dense<0.000000e+00> : vector<8x128xf32>
    %88 = tpu.matmul %87, %86, %cst_50 {dimension_numbers = #tpu.dot_dimension_numbers<[1], [0], [0], [1], [0, 0, 1, 1], [], []>} : vector<8x128xbf16>, vector<128x128xbf16>, vector<8x128xf32> -> vector<8x128xf32>
    %89 = vector.shape_cast %13 : vector<128xf32> to vector<1x128xf32>
    %90 = vector.broadcast %89 : vector<1x128xf32> to vector<8x128xf32>
    %91 = arith.addf %88, %90 : vector<8x128xf32>
    %cst_51 = arith.constant 0.000000e+00 : f32
    %92 = vector.broadcast %cst_51 : f32 to vector<8x128xf32>
    %93 = arith.maximumf %91, %92 : vector<8x128xf32>
    %c0_52 = arith.constant 0 : index
    %c4_53 = arith.constant 4 : index
    %c0_54 = arith.constant 0 : index
    %c0_55 = arith.constant 0 : index
    %94 = vector.load %arg3[%c0_52, %c4_53, %c0_54, %c0_55] : memref<1x5x128x128xbf16, #tpu.memory_space<vmem>>, vector<1x1x128x128xbf16>
    %95 = vector.shape_cast %94 : vector<1x1x128x128xbf16> to vector<128x128xbf16>
    %96 = arith.truncf %93 : vector<8x128xf32> to vector<8x128xbf16>
    %cst_56 = arith.constant dense<0.000000e+00> : vector<8x128xf32>
    %97 = tpu.matmul %96, %95, %cst_56 {dimension_numbers = #tpu.dot_dimension_numbers<[1], [0], [0], [1], [0, 0, 1, 1], [], []>} : vector<8x128xbf16>, vector<128x128xbf16>, vector<8x128xf32> -> vector<8x128xf32>
    %98 = arith.addf %84, %97 : vector<8x128xf32>
    %99 = vector.shape_cast %15 : vector<128xf32> to vector<1x128xf32>
    %100 = vector.broadcast %99 : vector<1x128xf32> to vector<8x128xf32>
    %101 = arith.addf %98, %100 : vector<8x128xf32>
    %cst_57 = arith.constant dense<0.000000e+00> : vector<8xf32>
    %102 = vector.multi_reduction <add>, %101, %cst_57 [1] : vector<8x128xf32> to vector<8xf32>
    %103 = vector.shape_cast %102 : vector<8xf32> to vector<8x1xf32>
    %cst_58 = arith.constant 1.280000e+02 : f32
    %104 = vector.broadcast %cst_58 : f32 to vector<8x1xf32>
    %105 = arith.divf %103, %104 : vector<8x1xf32>
    %106 = vector.broadcast %105 : vector<8x1xf32> to vector<8x128xf32>
    %107 = arith.subf %101, %106 : vector<8x128xf32>
    %108 = arith.mulf %107, %107 : vector<8x128xf32>
    %cst_59 = arith.constant dense<0.000000e+00> : vector<8xf32>
    %109 = vector.multi_reduction <add>, %108, %cst_59 [1] : vector<8x128xf32> to vector<8xf32>
    %110 = vector.shape_cast %109 : vector<8xf32> to vector<8x1xf32>
    %cst_60 = arith.constant 1.280000e+02 : f32
    %111 = vector.broadcast %cst_60 : f32 to vector<8x1xf32>
    %112 = arith.divf %110, %111 : vector<8x1xf32>
    %cst_61 = arith.constant 9.99999974E-6 : f32
    %113 = vector.broadcast %cst_61 : f32 to vector<8x1xf32>
    %114 = arith.addf %112, %113 : vector<8x1xf32>
    %115 = math.rsqrt %114 : vector<8x1xf32>
    %116 = vector.broadcast %115 : vector<8x1xf32> to vector<8x128xf32>
    %117 = arith.mulf %107, %116 : vector<8x128xf32>
    %118 = vector.shape_cast %21 : vector<128xf32> to vector<1x128xf32>
    %119 = vector.broadcast %118 : vector<1x128xf32> to vector<8x128xf32>
    %120 = arith.mulf %117, %119 : vector<8x128xf32>
    %121 = vector.shape_cast %23 : vector<128xf32> to vector<1x128xf32>
    %122 = vector.broadcast %121 : vector<1x128xf32> to vector<8x128xf32>
    %123 = arith.addf %120, %122 : vector<8x128xf32>
    %124 = arith.select %0, %123, %101 : vector<8x128xf32>
    %125 = arith.index_cast %arg1 : i32 to index
    %c0_62 = arith.constant 0 : index
    %c0_63 = arith.constant 0 : index
    %126 = vector.load %arg6[%125, %c0_62, %c0_63] : memref<2x8x128xf32, #tpu.memory_space<vmem>>, vector<1x8x128xf32>
    %127 = vector.shape_cast %126 : vector<1x8x128xf32> to vector<8x128xf32>
    %128 = vector.shape_cast %124 : vector<8x128xf32> to vector<1x8x128xf32>
    tpu.vector_store %arg6[%125, %c0_62, %c0_63], %128 {strides = array<i32>} : memref<2x8x128xf32, #tpu.memory_space<vmem>>, vector<1x8x128xf32>,
    %c0_64 = arith.constant 0 : index
    %c0_65 = arith.constant 0 : index
    %c0_66 = arith.constant 0 : index
    %129 = vector.load %arg5[%c0_64, %c0_65, %c0_66] : memref<1x8x128xf32, #tpu.memory_space<vmem>>, vector<1x8x128xf32>
    %130 = vector.shape_cast %129 : vector<1x8x128xf32> to vector<8x128xf32>
    %131 = vector.shape_cast %124 : vector<8x128xf32> to vector<1x8x128xf32>
    tpu.vector_store %arg5[%c0_64, %c0_65, %c0_66], %131 {strides = array<i32>} : memref<1x8x128xf32, #tpu.memory_space<vmem>>, vector<1x8x128xf32>,
    return
  }
  func.func @transform_0(%arg0: i32, %arg1: i32) -> (i32, i32, i32) {
    %c0_i32 = arith.constant 0 : i32
    %c0_i32_0 = arith.constant 0 : i32
    %c0_i32_1 = arith.constant 0 : i32
    return %arg1, %c0_i32, %c0_i32_0 : i32, i32, i32
  }
  func.func @transform_1(%arg0: i32, %arg1: i32) -> (i32, i32, i32, i32) {
    %c0_i32 = arith.constant 0 : i32
    %c0_i32_0 = arith.constant 0 : i32
    %c0_i32_1 = arith.constant 0 : i32
    %c0_i32_2 = arith.constant 0 : i32
    return %arg0, %c0_i32, %c0_i32_0, %c0_i32_1 : i32, i32, i32, i32
  }
  func.func @transform_2(%arg0: i32, %arg1: i32) -> (i32, i32, i32) {
    %c0_i32 = arith.constant 0 : i32
    %c0_i32_0 = arith.constant 0 : i32
    %c0_i32_1 = arith.constant 0 : i32
    return %arg0, %c0_i32, %c0_i32_0 : i32, i32, i32
  }
  func.func @transform_3(%arg0: i32, %arg1: i32) -> (i32, i32, i32) {
    %c0_i32 = arith.constant 0 : i32
    %c0_i32_0 = arith.constant 0 : i32
    %c0_i32_1 = arith.constant 0 : i32
    return %arg1, %c0_i32, %c0_i32_0 : i32, i32, i32
  }
}

</mosaic_0001>

<llo_original>
// kernel: graph_ed_forward.1
$region0: #{graph_ed_forward.1}
  #allocation0 [shape = 'u32[]', space=smem, size = 0x4, offset = 0x4, fixed_abs, tag = 'smem constant byte address 0x4 - core index']
  #allocation1 [shape = 'u32[144,128]{1,0:T(1,128)}', space=vmem, size = 0x12000, scoped, tag = 'internal scratch']
  #allocation2 [shape = 'f32[2,8,128]{2,1,0:T(8,128)}', space=vmem, size = 0x2000, scoped, tag = 'scratch operand']
  %s0 = inlined_call_operand.vmem [shape: f32[2,8,128], index: 0, kind: input, shape index: {}]
  %s1 = inlined_call_operand.hbm [shape: bf16[4,5,128,128], index: 1, kind: input, shape index: {}]
  %s2 = inlined_call_operand.vmem [shape: f32[4,9,128], index: 2, kind: input, shape index: {}]
  %s3 = inlined_call_operand.hbm [shape: f32[2,8,128], index: 3, kind: output, shape index: {}]
  %s4 = sld [smem:[#allocation0]]
  $region53: #{graph_ed_forward.1} parent=0
    _
  %s6 = ssub.s32 1, %s4
  %s7 = scalar_select 0, %s6, %s4
  $region1: #{graph_ed_forward.1} parent=0
    #allocation3 [shape = 'u8[327680]{0}', space=vmem, size = 0x50000, scoped, tag = 'input window, operand 1']
    #allocation4 [shape = 's32[2]{0}', space=sflag, size = 0x8, scoped, tag = 'scoped memory for graph_ed_forward.1']
    #allocation5 [shape = 's32[2]{0}', space=sflag, size = 0x8, scoped, tag = 'scoped memory for graph_ed_forward.1']
    #allocation6 [shape = 'u8[8192]{0}', space=vmem, size = 0x2000, scoped, tag = 'output window, operand 0']
    %8 = vsyncpa [#allocation4], 0
    %s9 = scalar_lea.sflag [#allocation4], 1
    %10 = vsyncpa %s9, 0
    %11 = vsyncpa [#allocation5], 0
    %s12 = scalar_lea.sflag [#allocation5], 1
    %13 = vsyncpa %s12, 0
    loop: start=0, step=1, limit=10
    $region2: #{graph_ed_forward.1} parent=1 // loop_pre_header
      _
    $region3: #{graph_ed_forward.1} parent=1 // loop_header
      %s15 = sphi 0, %s19
      %p16 = scmp.ge.s32.totalorder %s15, 10
      %s22 = sphi 0, %s34
      %s23 = sphi 0, %s30
      %s24 = sphi 0, %s22
      %s25 = sphi 0, %s23
      %s26 = sphi 0, %s24
      %s27 = sphi 0, %s25
      %s37 = sphi 0, %s39
      %s40 = sphi 0, %s37
      %s41 = sphi 0, %s40
      %s57 = sphi 0, %s41
      %s63 = sphi 0, %s65
      %s66 = sphi 0, %s63
      %s67 = sphi 0, %s66
      %s83 = sphi 0, %s67
      %s89 = sphi 0, %s91
      %s92 = sphi 0, %s89
      %s93 = sphi 0, %s92
      %s109 = sphi 0, %s93
      %s115 = sphi 0, %s117
      %s118 = sphi 0, %s115
      %s119 = sphi 0, %s118
      %s135 = sphi 0, %s119
    $region4: #{graph_ed_forward.1} parent=1 // loop_header_branch
      %18 = sbr.rel (%p16) target = $region8
    $region5: #{graph_ed_forward.1} parent=1 // loop_body
      %s20 = ssub.s32 %s15, 1
      %s21 = ssub.s32 %s15, 2
      %s28 = sadd.s32 1, %s23
      %p29 = scmp.ge.s32.totalorder %s28, 2
      %s30 = scalar_select %p29, 0, %s28
      %s31 = sadd.s32 1, %s22
      %s32 = scalar_select %p29, %s31, %s22
      %p33 = scmp.ge.s32.totalorder %s32, 4
      %s34 = scalar_select %p33, 0, %s32
      %s35 = ssub.s32 %s23, %s30
      %p36 = scmp.eq.s32.totalorder %s35, 0
      %s38 = sadd.s32 %s37, 1
      %s39 = scalar_select %p36, %s37, %s38
      %p42 = pneg %p36
      %p43 = scmp.eq.s32.totalorder %s15, 7
      %p44 = por %p42, %p43
      %p45 = scmp.ne.s32.totalorder %s37, %s40
      %p46 = scmp.eq.s32.totalorder %s15, 0
      %p47 = por %p45, %p46
      %p48 = scmp.ne.s32.totalorder %s37, %s40
      %p49 = scmp.eq.s32.totalorder %s20, 7
      %p50 = por %p48, %p49
      %p51 = scmp.ne.s32.totalorder %s40, %s41
      %p52 = scmp.eq.s32.totalorder %s20, 0
      %p53 = por %p51, %p52
      %p54 = scmp.ne.s32.totalorder %s40, %s41
      %p55 = scmp.eq.s32.totalorder %s21, 7
      %p56 = por %p54, %p55
      %p58 = scmp.ne.s32.totalorder %s41, %s57
      %p59 = scmp.eq.s32.totalorder %s21, 0
      %p60 = por %p58, %p59
      %s61 = ssub.s32 %s22, %s34
      %p62 = scmp.eq.s32.totalorder %s61, 0
      %s64 = sadd.s32 %s63, 1
      %s65 = scalar_select %p62, %s63, %s64
      %p68 = pneg %p62
      %p69 = scmp.eq.s32.totalorder %s15, 7
      %p70 = por %p68, %p69
      %p71 = scmp.ne.s32.totalorder %s63, %s66
      %p72 = scmp.eq.s32.totalorder %s15, 0
      %p73 = por %p71, %p72
      %p74 = scmp.ne.s32.totalorder %s63, %s66
      %p75 = scmp.eq.s32.totalorder %s20, 7
      %p76 = por %p74, %p75
      %p77 = scmp.ne.s32.totalorder %s66, %s67
      %p78 = scmp.eq.s32.totalorder %s20, 0
      %p79 = por %p77, %p78
      %p80 = scmp.ne.s32.totalorder %s66, %s67
      %p81 = scmp.eq.s32.totalorder %s21, 7
      %p82 = por %p80, %p81
      %p84 = scmp.ne.s32.totalorder %s67, %s83
      %p85 = scmp.eq.s32.totalorder %s21, 0
      %p86 = por %p84, %p85
      %s87 = ssub.s32 %s22, %s34
      %p88 = scmp.eq.s32.totalorder %s87, 0
      %s90 = sadd.s32 %s89, 1
      %s91 = scalar_select %p88, %s89, %s90
      %p94 = pneg %p88
      %p95 = scmp.eq.s32.totalorder %s15, 7
      %p96 = por %p94, %p95
      %p97 = scmp.ne.s32.totalorder %s89, %s92
      %p98 = scmp.eq.s32.totalorder %s15, 0
      %p99 = por %p97, %p98
      %p100 = scmp.ne.s32.totalorder %s89, %s92
      %p101 = scmp.eq.s32.totalorder %s20, 7
      %p102 = por %p100, %p101
      %p103 = scmp.ne.s32.totalorder %s92, %s93
      %p104 = scmp.eq.s32.totalorder %s20, 0
      %p105 = por %p103, %p104
      %p106 = scmp.ne.s32.totalorder %s92, %s93
      %p107 = scmp.eq.s32.totalorder %s21, 7
      %p108 = por %p106, %p107
      %p110 = scmp.ne.s32.totalorder %s93, %s109
      %p111 = scmp.eq.s32.totalorder %s21, 0
      %p112 = por %p110, %p111
      %s113 = ssub.s32 %s23, %s30
      %p114 = scmp.eq.s32.totalorder %s113, 0
      %s116 = sadd.s32 %s115, 1
      %s117 = scalar_select %p114, %s115, %s116
      %p120 = pneg %p114
      %p121 = scmp.eq.s32.totalorder %s15, 7
      %p122 = por %p120, %p121
      %p123 = scmp.ne.s32.totalorder %s115, %s118
      %p124 = scmp.eq.s32.totalorder %s15, 0
      %p125 = por %p123, %p124
      %p126 = scmp.ne.s32.totalorder %s115, %s118
      %p127 = scmp.eq.s32.totalorder %s20, 7
      %p128 = por %p126, %p127
      %p129 = scmp.ne.s32.totalorder %s118, %s119
      %p130 = scmp.eq.s32.totalorder %s20, 0
      %p131 = por %p129, %p130
      %p132 = scmp.ne.s32.totalorder %s118, %s119
      %p133 = scmp.eq.s32.totalorder %s21, 7
      %p134 = por %p132, %p133
      %p136 = scmp.ne.s32.totalorder %s119, %s135
      %p137 = scmp.eq.s32.totalorder %s21, 0
      %p138 = por %p136, %p137
      %p139 = scmp.le.s32.totalorder 1, %s15
      %p140 = scmp.lt.s32.totalorder %s15, 9
      %p141 = pnand %p139, %p140
      %p142 = pneg %p141
      // Predicated region
      $region9: #{graph_ed_forward.1} parent=5 // pred_check
        _
      $region10: #{graph_ed_forward.1} parent=5 // pred_check_branch
        %144 = sbr.rel (%p141) target = $region12
      $region11: #{graph_ed_forward.1} parent=5 // pred_region
        %s145 = ssub.s32 %s15, 1
      $region12: #{graph_ed_forward.1} parent=5 // pred_fallthru
        _
      %p146 = scmp.lt.s32.totalorder %s15, 8
      // Predicated region
      $region13: #{graph_ed_forward.1} parent=5 // pred_check
        %p147 = pneg %p146
      $region14: #{graph_ed_forward.1} parent=5 // pred_check_branch
        %149 = sbr.rel (%p147) target = $region16
      $region15: #{graph_ed_forward.1} parent=5 // pred_region
        // Predicated region
        $region17: #{graph_ed_forward.1} parent=15 // pred_check
          %p150 = pneg %p47
        $region18: #{graph_ed_forward.1} parent=15 // pred_check_branch
          %152 = sbr.rel (%p150) target = $region20
        $region19: #{graph_ed_forward.1} parent=15 // pred_region
          %p153 = scmp.lt.s32.totalorder %s23, 1
          %s154 = scalar_select %p153, %s23, 1
          %s155 = smul.addr %s154, 8
          %s156 = scalar_lea.vmem %s0, %s155
        $region20: #{graph_ed_forward.1} parent=15 // pred_fallthru
          _
        // Predicated region
        $region21: #{graph_ed_forward.1} parent=15 // pred_check
          %p157 = pneg %p73
        $region22: #{graph_ed_forward.1} parent=15 // pred_check_branch
          %159 = sbr.rel (%p157) target = $region24
        $region23: #{graph_ed_forward.1} parent=15 // pred_region
          %s160 = sand.u32 %s63, 1
          %s161 = scalar_lea.sflag [#allocation4], %s160
          %s162 = sand.u32 %s63, 1
          %s163 = smul.addr %s162, 320
          %s164 = scalar_lea.vmem [#allocation3], %s163
          %s166 = ssub.s32 5120, 5120
          %167 = vsyncadd %s161, %s166
          %s168 = smul.addr %s22, 80
          %s169 = smul.addr %s168, 64
          %s170 = scalar_lea.hbm %s1, %s169
          %s171 = sshll.u32 %s164, 4
          %s172 = int_to_ptr.vmem [resolvable:$true] %s171
          %177 = dma.hbm_to_vmem [thread:$0]  %s170, 5120, %s172, %s161, 64, 64, 4
        $region24: #{graph_ed_forward.1} parent=15 // pred_fallthru
          _
        // Predicated region
        $region25: #{graph_ed_forward.1} parent=15 // pred_check
          %p178 = pneg %p99
        $region26: #{graph_ed_forward.1} parent=15 // pred_check_branch
          %180 = sbr.rel (%p178) target = $region28
        $region27: #{graph_ed_forward.1} parent=15 // pred_region
          %p181 = scmp.lt.s32.totalorder %s22, 3
          %s182 = scalar_select %p181, %s22, 3
          %s183 = smul.addr %s182, 2
          %s184 = smul.addr %s183, 8
          %s185 = scalar_lea.vmem %s2, %s184
        $region28: #{graph_ed_forward.1} parent=15 // pred_fallthru
          _
      $region16: #{graph_ed_forward.1} parent=5 // pred_fallthru
        _
      %p186 = scmp.le.s32.totalorder 1, %s15
      %p187 = scmp.lt.s32.totalorder %s15, 9
      %p188 = pnand %p186, %p187
      %p189 = pneg %p188
      // Predicated region
      $region29: #{graph_ed_forward.1} parent=5 // pred_check
        _
      $region30: #{graph_ed_forward.1} parent=5 // pred_check_branch
        %191 = sbr.rel (%p188) target = $region32
      $region31: #{graph_ed_forward.1} parent=5 // pred_region
        %s192 = ssub.s32 %s15, 1
        %s193 = sand.u32 %s66, 1
        %s194 = scalar_lea.sflag [#allocation4], %s193
        %s195 = sand.u32 %s66, 1
        %s196 = smul.addr %s195, 320
        %s197 = scalar_lea.vmem [#allocation3], %s196
        // Predicated region
        $region33: #{graph_ed_forward.1} parent=31 // pred_check
          %p198 = pneg %p79
        $region34: #{graph_ed_forward.1} parent=31 // pred_check_branch
          %200 = sbr.rel (%p198) target = $region36
        $region35: #{graph_ed_forward.1} parent=31 // pred_region
          %201 = dma.done %s194, 5120
        $region36: #{graph_ed_forward.1} parent=31 // pred_fallthru
          _
        %p202 = scmp.lt.s32.totalorder %s25, 1
        %s203 = scalar_select %p202, %s25, 1
        %s204 = smul.addr %s203, 8
        %s205 = scalar_lea.vmem %s0, %s204
        %p206 = pneg %p53
        %p207 = pneg %p50
        %s208 = sand.u32 %s66, 1
        %s209 = scalar_lea.sflag [#allocation4], %s208
        %s210 = sand.u32 %s66, 1
        %s211 = smul.addr %s210, 320
        %s212 = scalar_lea.vmem [#allocation3], %s211
        %p213 = pneg %p79
        %p214 = pneg %p76
        %p215 = scmp.lt.s32.totalorder %s24, 3
        %s216 = scalar_select %p215, %s24, 3
        %s217 = smul.addr %s216, 2
        %s218 = smul.addr %s217, 8
        %s219 = scalar_lea.vmem %s2, %s218
        %p220 = pneg %p105
        %p221 = pneg %p102
        %p222 = pneg %p131
        %p223 = pneg %p128
        %s224 = sand.u32 %s118, 1
        %s225 = scalar_lea.sflag [#allocation5], %s224
        %s226 = sand.u32 %s118, 1
        %s227 = smul.addr %s226, 8
        %s228 = scalar_lea.vmem [#allocation6], %s227
        %p229 = scmp.lt.s32.totalorder %s25, 1
        %s230 = scalar_select %p229, %s25, 1
        %s231 = smul.addr %s230, 8
        %s232 = scalar_lea.vmem %s0, %s231
        %p233 = scmp.lt.s32.totalorder %s24, 3
        %s234 = scalar_select %p233, %s24, 3
        %s235 = smul.addr %s234, 2
        %s236 = smul.addr %s235, 8
        %s237 = scalar_lea.vmem %s2, %s236
        %p239 = scmp.eq.s32.totalorder %s24, 0
        // Predicated region
        $region37: #{graph_ed_forward.1} parent=31 // pred_check
          %p240 = pneg %p239
        $region38: #{graph_ed_forward.1} parent=31 // pred_check_branch
          %242 = sbr.rel (%p240) target = $region40
        $region39: #{graph_ed_forward.1} parent=31 // pred_region
          %v243 = vld [vmem:[%s232] sm:$0xff]
          %s244 = smul.u32 %s25, 8
          %s245 = scalar_lea.vmem [#allocation2], %s244
          %246 = vst [vmem:[%s245] sm:$0xff] %v243
        $region40: #{graph_ed_forward.1} parent=31 // pred_fallthru
          _
        %s247 = smul.u32 %s25, 8
        %s248 = scalar_lea.vmem [#allocation2], %s247
        %v249 = vld [vmem:[%s248] sm:$0xff]
        %v250 = vld [vmem:[%s237] sm:$0x1]
        %v251 = vld [vmem:[%s237 + $0x1] sm:$0x1]
        %v252 = vld [vmem:[%s237 + $0x2] sm:$0x1]
        %v253 = vld [vmem:[%s237 + $0x3] sm:$0x1]
        %v254 = vld [vmem:[%s237 + $0x4] sm:$0x1]
        %v255 = vld [vmem:[%s237 + $0x5] sm:$0x1]
        %v256 = vld [vmem:[%s237 + $0x6] sm:$0x1]
        %v257 = vld [vmem:[%s237 + $0x7] sm:$0x1]
        %v258 = vld [vmem:[%s237 + $0x8] sm:$0x1]
        %v259 = vld [vmem:[%s197] sm:$0xf]
        %v260 = vld [vmem:[%s197 + $0x4] sm:$0xf]
        %v261 = vld [vmem:[%s197 + $0x8] sm:$0xf]
        %v262 = vld [vmem:[%s197 + $0xc] sm:$0xf]
        %v263 = vld [vmem:[%s197 + $0x10] sm:$0xf]
        %v264 = vld [vmem:[%s197 + $0x14] sm:$0xf]
        %v265 = vld [vmem:[%s197 + $0x18] sm:$0xf]
        %v266 = vld [vmem:[%s197 + $0x1c] sm:$0xf]
        %v267 = vld [vmem:[%s197 + $0x20] sm:$0xf]
        %v268 = vld [vmem:[%s197 + $0x24] sm:$0xf]
        %v269 = vld [vmem:[%s197 + $0x28] sm:$0xf]
        %v270 = vld [vmem:[%s197 + $0x2c] sm:$0xf]
        %v271 = vld [vmem:[%s197 + $0x30] sm:$0xf]
        %v272 = vld [vmem:[%s197 + $0x34] sm:$0xf]
        %v273 = vld [vmem:[%s197 + $0x38] sm:$0xf]
        %v274 = vld [vmem:[%s197 + $0x3c] sm:$0xf]
        %v275 = vpack.c.bf16 %v249, %v249
        %v276 = vlaneseq
        %v277 = vshrl.u32 %v276, 7
        %v278 = vsub.s32 0, %v277
        %v279 = vrot.slane %v250, %v278
        %v296 = vunpack.c.l.b16 %v259
        %v297 = vunpack.c.l.b16 %v260
        %v298 = vunpack.c.l.b16 %v261
        %v299 = vunpack.c.l.b16 %v262
        %v300 = vunpack.c.l.b16 %v263
        %v301 = vunpack.c.l.b16 %v264
        %v302 = vunpack.c.l.b16 %v265
        %v303 = vunpack.c.l.b16 %v266
        %v304 = vunpack.c.l.b16 %v267
        %v305 = vunpack.c.l.b16 %v268
        %v306 = vunpack.c.l.b16 %v269
        %v307 = vunpack.c.l.b16 %v270
        %v308 = vunpack.c.l.b16 %v271
        %v309 = vunpack.c.l.b16 %v272
        %v310 = vunpack.c.l.b16 %v273
        %v311 = vunpack.c.l.b16 %v274
        %v312 = vpack.c.b16 %v297, %v296
        %v313 = vpack.c.b16 %v299, %v298
        %v314 = vpack.c.b16 %v301, %v300
        %v315 = vpack.c.b16 %v303, %v302
        %v316 = vpack.c.b16 %v305, %v304
        %v317 = vpack.c.b16 %v307, %v306
        %v318 = vpack.c.b16 %v309, %v308
        %v319 = vpack.c.b16 %v311, %v310
        %328 = vmatprep.subr.bf16.mxu0 0
        %329 = vmatpush1.bf16.msra.mxu0 %v319
        %330 = vmatprep.subr.bf16.mxu0 0
        %331 = vmatpush1.bf16.msra.mxu0 %v318
        %332 = vmatprep.subr.bf16.mxu0 0
        %333 = vmatpush1.bf16.msra.mxu0 %v317
        %334 = vmatprep.subr.bf16.mxu0 0
        %335 = vmatpush1.bf16.msra.mxu0 %v316
        %336 = vmatprep.subr.bf16.mxu0 0
        %337 = vmatpush1.bf16.msra.mxu0 %v315
        %338 = vmatprep.subr.bf16.mxu0 0
        %339 = vmatpush1.bf16.msra.mxu0 %v314
        %340 = vmatprep.subr.bf16.mxu0 0
        %341 = vmatpush1.bf16.msra.mxu0 %v313
        %342 = vmatprep.subr.bf16.mxu0 0
        %343 = vmatpush1.bf16.msra.mxu0 %v312
        %344 = vmatprep.subr.bf16.mxu0 0
        %345 = vmatpush2.bf16.msra.mxu0 0
        %346 = vmatprep.subr.bf16.mxu0 0
        %347 = vmatpush2.bf16.msra.mxu0 0
        %348 = vmatprep.subr.bf16.mxu0 0
        %349 = vmatpush2.bf16.msra.mxu0 0
        %350 = vmatprep.subr.bf16.mxu0 0
        %351 = vmatpush2.bf16.msra.mxu0 0
        %352 = vmatprep.subr.bf16.mxu0 0
        %353 = vmatpush2.bf16.msra.mxu0 0
        %354 = vmatprep.subr.bf16.mxu0 0
        %355 = vmatpush2.bf16.msra.mxu0 0
        %356 = vmatprep.subr.bf16.mxu0 0
        %357 = vmatpush2.bf16.msra.mxu0 0
        %358 = vmatprep.subr.bf16.mxu0 0
        %359 = vmatpush2.bf16.msra.mxu0 0
        %360 = vmatprep.mubr.bf16.mxu0 0
        %361 = vmatmul.mubr.bf16.gmra.mxu0 %v275
        %v362 = vpop.f32.mrf.mxu0
        %v363 = vadd.f32 %v279, %v362
        %v364 = vpop.f32.mrf.mxu0
        %v365 = vpop.f32.mrf.mxu0
        %v366 = vpop.f32.mrf.mxu0
        %367 = vdwg.mxu0
        %s368 = scalar_lea.vmem %s197, 64 [#allocation3]
        %v369 = vld [vmem:[%s368] sm:$0xf]
        %v370 = vld [vmem:[%s368 + $0x4] sm:$0xf]
        %v371 = vld [vmem:[%s368 + $0x8] sm:$0xf]
        %v372 = vld [vmem:[%s368 + $0xc] sm:$0xf]
        %v373 = vld [vmem:[%s368 + $0x10] sm:$0xf]
        %v374 = vld [vmem:[%s368 + $0x14] sm:$0xf]
        %v375 = vld [vmem:[%s368 + $0x18] sm:$0xf]
        %v376 = vld [vmem:[%s368 + $0x1c] sm:$0xf]
        %v377 = vld [vmem:[%s368 + $0x20] sm:$0xf]
        %v378 = vld [vmem:[%s368 + $0x24] sm:$0xf]
        %v379 = vld [vmem:[%s368 + $0x28] sm:$0xf]
        %v380 = vld [vmem:[%s368 + $0x2c] sm:$0xf]
        %v381 = vld [vmem:[%s368 + $0x30] sm:$0xf]
        %v382 = vld [vmem:[%s368 + $0x34] sm:$0xf]
        %v383 = vld [vmem:[%s368 + $0x38] sm:$0xf]
        %v384 = vld [vmem:[%s368 + $0x3c] sm:$0xf]
        %v385 = vlaneseq
        %v386 = vshrl.u32 %v385, 7
        %v387 = vsub.s32 0, %v386
        %v388 = vrot.slane %v251, %v387
        %v405 = vunpack.c.l.b16 %v369
        %v406 = vunpack.c.l.b16 %v370
        %v407 = vunpack.c.l.b16 %v371
        %v408 = vunpack.c.l.b16 %v372
        %v409 = vunpack.c.l.b16 %v373
        %v410 = vunpack.c.l.b16 %v374
        %v411 = vunpack.c.l.b16 %v375
        %v412 = vunpack.c.l.b16 %v376
        %v413 = vunpack.c.l.b16 %v377
        %v414 = vunpack.c.l.b16 %v378
        %v415 = vunpack.c.l.b16 %v379
        %v416 = vunpack.c.l.b16 %v380
        %v417 = vunpack.c.l.b16 %v381
        %v418 = vunpack.c.l.b16 %v382
        %v419 = vunpack.c.l.b16 %v383
        %v420 = vunpack.c.l.b16 %v384
        %v421 = vpack.c.b16 %v406, %v405
        %v422 = vpack.c.b16 %v408, %v407
        %v423 = vpack.c.b16 %v410, %v409
        %v424 = vpack.c.b16 %v412, %v411
        %v425 = vpack.c.b16 %v414, %v413
        %v426 = vpack.c.b16 %v416, %v415
        %v427 = vpack.c.b16 %v418, %v417
        %v428 = vpack.c.b16 %v420, %v419
        %437 = vmatprep.subr.bf16.mxu0 0
        %438 = vmatpush1.bf16.msra.mxu0 %v428
        %439 = vmatprep.subr.bf16.mxu0 0
        %440 = vmatpush1.bf16.msra.mxu0 %v427
        %441 = vmatprep.subr.bf16.mxu0 0
        %442 = vmatpush1.bf16.msra.mxu0 %v426
        %443 = vmatprep.subr.bf16.mxu0 0
        %444 = vmatpush1.bf16.msra.mxu0 %v425
        %445 = vmatprep.subr.bf16.mxu0 0
        %446 = vmatpush1.bf16.msra.mxu0 %v424
        %447 = vmatprep.subr.bf16.mxu0 0
        %448 = vmatpush1.bf16.msra.mxu0 %v423
        %449 = vmatprep.subr.bf16.mxu0 0
        %450 = vmatpush1.bf16.msra.mxu0 %v422
        %451 = vmatprep.subr.bf16.mxu0 0
        %452 = vmatpush1.bf16.msra.mxu0 %v421
        %453 = vmatprep.subr.bf16.mxu0 0
        %454 = vmatpush2.bf16.msra.mxu0 0
        %455 = vmatprep.subr.bf16.mxu0 0
        %456 = vmatpush2.bf16.msra.mxu0 0
        %457 = vmatprep.subr.bf16.mxu0 0
        %458 = vmatpush2.bf16.msra.mxu0 0
        %459 = vmatprep.subr.bf16.mxu0 0
        %460 = vmatpush2.bf16.msra.mxu0 0
        %461 = vmatprep.subr.bf16.mxu0 0
        %462 = vmatpush2.bf16.msra.mxu0 0
        %463 = vmatprep.subr.bf16.mxu0 0
        %464 = vmatpush2.bf16.msra.mxu0 0
        %465 = vmatprep.subr.bf16.mxu0 0
        %466 = vmatpush2.bf16.msra.mxu0 0
        %467 = vmatprep.subr.bf16.mxu0 0
        %468 = vmatpush2.bf16.msra.mxu0 0
        %469 = vmatprep.mubr.bf16.mxu0 0
        %470 = vmatmul.mubr.bf16.gmra.mxu0 %v275
        %v471 = vpop.f32.mrf.mxu0
        %v472 = vadd.f32 %v388, %v471
        %v473 = vpop.f32.mrf.mxu0
        %v474 = vpop.f32.mrf.mxu0
        %v475 = vpop.f32.mrf.mxu0
        %476 = vdwg.mxu0
        %477 = vmatprep.subr.mxu0 0.0
        %478 = vmatpush1.xpose.msra.mxu0 0.0
        %479 = vmatprep.subr.mxu0 0.0
        %480 = vmatpush1.xpose.msra.mxu0 0.0
        %481 = vmatprep.subr.mxu0 0.0
        %482 = vmatpush1.xpose.msra.mxu0 0.0
        %483 = vmatprep.subr.mxu0 0.0
        %484 = vmatpush1.xpose.msra.mxu0 0.0
        %485 = vmatprep.subr.mxu0 0.0
        %486 = vmatpush1.xpose.msra.mxu0 0.0
        %487 = vmatprep.subr.mxu0 0.0
        %488 = vmatpush1.xpose.msra.mxu0 0.0
        %489 = vmatprep.subr.mxu0 0.0
        %490 = vmatpush1.xpose.msra.mxu0 0.0
        %491 = vmatprep.subr.mxu0 0.0
        %492 = vmatpush1.xpose.msra.mxu0 0.0
        %493 = vmatprep.subr.mxu0 0.0
        %494 = vmatpush1.xpose.msra.mxu0 0.0
        %495 = vmatprep.subr.mxu0 0.0
        %496 = vmatpush1.xpose.msra.mxu0 0.0
        %497 = vmatprep.subr.mxu0 0.0
        %498 = vmatpush1.xpose.msra.mxu0 0.0
        %499 = vmatprep.subr.mxu0 0.0
        %500 = vmatpush1.xpose.msra.mxu0 0.0
        %501 = vmatprep.subr.mxu0 0.0
        %502 = vmatpush1.xpose.msra.mxu0 0.0
        %503 = vmatprep.subr.mxu0 0.0
        %504 = vmatpush1.xpose.msra.mxu0 0.0
        %505 = vmatprep.subr.mxu0 0.0
        %506 = vmatpush1.xpose.msra.mxu0 0.0
        %507 = vmatprep.subr.mxu0 0.0
        %508 = vmatpush1.xpose.msra.mxu0 %v472
        %509 = vmatprep.subr.mxu0 0.0
        %510 = vmatpush2.xpose.msra.mxu0 0.0
        %511 = vmatprep.subr.mxu0 0.0
        %512 = vmatpush2.xpose.msra.mxu0 0.0
        %513 = vmatprep.subr.mxu0 0.0
        %514 = vmatpush2.xpose.msra.mxu0 0.0
        %515 = vmatprep.subr.mxu0 0.0
        %516 = vmatpush2.xpose.msra.mxu0 0.0
        %517 = vmatprep.subr.mxu0 0.0
        %518 = vmatpush2.xpose.msra.mxu0 0.0
        %519 = vmatprep.subr.mxu0 0.0
        %520 = vmatpush2.xpose.msra.mxu0 0.0
        %521 = vmatprep.subr.mxu0 0.0
        %522 = vmatpush2.xpose.msra.mxu0 0.0
        %523 = vmatprep.subr.mxu0 0.0
        %524 = vmatpush2.xpose.msra.mxu0 0.0
        %525 = vmatprep.subr.mxu0 0.0
        %526 = vmatpush2.xpose.msra.mxu0 0.0
        %527 = vmatprep.subr.mxu0 0.0
        %528 = vmatpush2.xpose.msra.mxu0 0.0
        %529 = vmatprep.subr.mxu0 0.0
        %530 = vmatpush2.xpose.msra.mxu0 0.0
        %531 = vmatprep.subr.mxu0 0.0
        %532 = vmatpush2.xpose.msra.mxu0 0.0
        %533 = vmatprep.subr.mxu0 0.0
        %534 = vmatpush2.xpose.msra.mxu0 0.0
        %535 = vmatprep.subr.mxu0 0.0
        %536 = vmatpush2.xpose.msra.mxu0 0.0
        %537 = vmatprep.subr.mxu0 0.0
        %538 = vmatpush2.xpose.msra.mxu0 0.0
        %539 = vmatprep.subr.mxu0 0.0
        %540 = vmatpush2.xpose.msra.mxu0 0.0
        %541 = vmatprep.mubr.f32.mxu0 0.0
        %542 = vmatmul.mubr.f32.gmra.mxu0 %v363
        %v543 = vpop.f32.mrf.mxu0
        %v544 = vadd.f32 0.0, %v543
        %v545 = vpop.f32.mrf.mxu0
        %546 = vdwg.mxu0
        %v547 = vmul.f32 %v363, %v363
        %548 = vadd.xlane.f32.xlu0 %v547
        %v549 = vpop.xlane.xlu0 %548
        %v550 = vmul.f32 %v472, %v472
        %551 = vadd.xlane.f32.xlu0 %v550
        %v552 = vpop.xlane.xlu0 %551
        %v553 = vmul.f32 %v544, 2.0
        %554 = vxpose.xlu0.b32.start [1/16] %v552, 128
        %555 = vxpose.xlu0.b32.cont [2/16] 0.0, 128
        %556 = vxpose.xlu0.b32.cont [3/16] 0.0, 128
        %557 = vxpose.xlu0.b32.cont [4/16] 0.0, 128
        %558 = vxpose.xlu0.b32.cont [5/16] 0.0, 128
        %559 = vxpose.xlu0.b32.cont [6/16] 0.0, 128
        %560 = vxpose.xlu0.b32.cont [7/16] 0.0, 128
        %561 = vxpose.xlu0.b32.cont [8/16] 0.0, 128
        %562 = vxpose.xlu0.b32.cont [9/16] 0.0, 128
        %563 = vxpose.xlu0.b32.cont [10/16] 0.0, 128
        %564 = vxpose.xlu0.b32.cont [11/16] 0.0, 128
        %565 = vxpose.xlu0.b32.cont [12/16] 0.0, 128
        %566 = vxpose.xlu0.b32.cont [13/16] 0.0, 128
        %567 = vxpose.xlu0.b32.cont [14/16] 0.0, 128
        %568 = vxpose.xlu0.b32.cont [15/16] 0.0, 128
        %569 = vxpose.xlu0.b32.end [16/16] 0.0, 128
        %v570 = vpop.trf.xlu0
        %v571 = vpop.trf.xlu0
        %v572 = vpop.trf.xlu0
        %v573 = vpop.trf.xlu0
        %v574 = vpop.trf.xlu0
        %v575 = vpop.trf.xlu0
        %v576 = vpop.trf.xlu0
        %v577 = vpop.trf.xlu0
        %v578 = vpop.trf.xlu0
        %v579 = vpop.trf.xlu0
        %v580 = vpop.trf.xlu0
        %v581 = vpop.trf.xlu0
        %v582 = vpop.trf.xlu0
        %v583 = vpop.trf.xlu0
        %v584 = vpop.trf.xlu0
        %v585 = vpop.trf.xlu0
        %v586 = vlaneseq
        %v587 = vshrl.u32 %v586, 7
        %v588 = vsub.s32 0, %v587
        %v589 = vrot.slane %v570, %v588
        %v590 = vadd.f32 %v549, %v589
        %v591 = vrcp.pop %v590
        %v592 = vmul.f32 %v553, %v591
        %593 = vxpose.xlu0.b32.start [1/16] %v592, 128
        %594 = vxpose.xlu0.b32.cont [2/16] 0.0, 128
        %595 = vxpose.xlu0.b32.cont [3/16] 0.0, 128
        %596 = vxpose.xlu0.b32.cont [4/16] 0.0, 128
        %597 = vxpose.xlu0.b32.cont [5/16] 0.0, 128
        %598 = vxpose.xlu0.b32.cont [6/16] 0.0, 128
        %599 = vxpose.xlu0.b32.cont [7/16] 0.0, 128
        %600 = vxpose.xlu0.b32.cont [8/16] 0.0, 128
        %601 = vxpose.xlu0.b32.cont [9/16] 0.0, 128
        %602 = vxpose.xlu0.b32.cont [10/16] 0.0, 128
        %603 = vxpose.xlu0.b32.cont [11/16] 0.0, 128
        %604 = vxpose.xlu0.b32.cont [12/16] 0.0, 128
        %605 = vxpose.xlu0.b32.cont [13/16] 0.0, 128
        %606 = vxpose.xlu0.b32.cont [14/16] 0.0, 128
        %607 = vxpose.xlu0.b32.cont [15/16] 0.0, 128
        %608 = vxpose.xlu0.b32.end [16/16] 0.0, 128
        %v609 = vpop.trf.xlu0
        %v610 = vpop.trf.xlu0
        %v611 = vpop.trf.xlu0
        %v612 = vpop.trf.xlu0
        %v613 = vpop.trf.xlu0
        %v614 = vpop.trf.xlu0
        %v615 = vpop.trf.xlu0
        %v616 = vpop.trf.xlu0
        %v617 = vpop.trf.xlu0
        %v618 = vpop.trf.xlu0
        %v619 = vpop.trf.xlu0
        %v620 = vpop.trf.xlu0
        %v621 = vpop.trf.xlu0
        %v622 = vpop.trf.xlu0
        %v623 = vpop.trf.xlu0
        %v624 = vpop.trf.xlu0
        %vm625 = vcmask 64512
        %v627 = vsel %vm625, %v609, 0
        %629 = vmatprep.subr.mxu0 0.0
        %630 = vmatpush1.msra.mxu0 0.0
        %631 = vmatprep.subr.mxu0 0.0
        %632 = vmatpush1.msra.mxu0 0.0
        %633 = vmatprep.subr.mxu0 0.0
        %634 = vmatpush1.msra.mxu0 0.0
        %635 = vmatprep.subr.mxu0 0.0
        %636 = vmatpush1.msra.mxu0 0.0
        %637 = vmatprep.subr.mxu0 0.0
        %638 = vmatpush1.msra.mxu0 0.0
        %639 = vmatprep.subr.mxu0 0.0
        %640 = vmatpush1.msra.mxu0 0.0
        %641 = vmatprep.subr.mxu0 0.0
        %642 = vmatpush1.msra.mxu0 0.0
        %643 = vmatprep.subr.mxu0 0.0
        %644 = vmatpush1.msra.mxu0 0.0
        %645 = vmatprep.subr.mxu0 0.0
        %646 = vmatpush1.msra.mxu0 0.0
        %647 = vmatprep.subr.mxu0 0.0
        %648 = vmatpush1.msra.mxu0 0.0
        %649 = vmatprep.subr.mxu0 0.0
        %650 = vmatpush1.msra.mxu0 0.0
        %651 = vmatprep.subr.mxu0 0.0
        %652 = vmatpush1.msra.mxu0 0.0
        %653 = vmatprep.subr.mxu0 0.0
        %654 = vmatpush1.msra.mxu0 0.0
        %655 = vmatprep.subr.mxu0 0.0
        %656 = vmatpush1.msra.mxu0 0.0
        %657 = vmatprep.subr.mxu0 0.0
        %658 = vmatpush1.msra.mxu0 0.0
        %659 = vmatprep.subr.mxu0 0.0
        %660 = vmatpush1.msra.mxu0 %v363
        %661 = vmatprep.subr.mxu0 0.0
        %662 = vmatpush2.msra.mxu0 0.0
        %663 = vmatprep.subr.mxu0 0.0
        %664 = vmatpush2.msra.mxu0 0.0
        %665 = vmatprep.subr.mxu0 0.0
        %666 = vmatpush2.msra.mxu0 0.0
        %667 = vmatprep.subr.mxu0 0.0
        %668 = vmatpush2.msra.mxu0 0.0
        %669 = vmatprep.subr.mxu0 0.0
        %670 = vmatpush2.msra.mxu0 0.0
        %671 = vmatprep.subr.mxu0 0.0
        %672 = vmatpush2.msra.mxu0 0.0
        %673 = vmatprep.subr.mxu0 0.0
        %674 = vmatpush2.msra.mxu0 0.0
        %675 = vmatprep.subr.mxu0 0.0
        %676 = vmatpush2.msra.mxu0 0.0
        %677 = vmatprep.subr.mxu0 0.0
        %678 = vmatpush2.msra.mxu0 0.0
        %679 = vmatprep.subr.mxu0 0.0
        %680 = vmatpush2.msra.mxu0 0.0
        %681 = vmatprep.subr.mxu0 0.0
        %682 = vmatpush2.msra.mxu0 0.0
        %683 = vmatprep.subr.mxu0 0.0
        %684 = vmatpush2.msra.mxu0 0.0
        %685 = vmatprep.subr.mxu0 0.0
        %686 = vmatpush2.msra.mxu0 0.0
        %687 = vmatprep.subr.mxu0 0.0
        %688 = vmatpush2.msra.mxu0 0.0
        %689 = vmatprep.subr.mxu0 0.0
        %690 = vmatpush2.msra.mxu0 0.0
        %691 = vmatprep.subr.mxu0 0.0
        %692 = vmatpush2.msra.mxu0 0.0
        %693 = vmatprep.mubr.f32.mxu0 0.0
        %694 = vmatmul.mubr.f32.gmra.mxu0 %v627
        %v695 = vpop.f32.mrf.mxu0
        %v696 = vadd.f32 0.0, %v695
        %v697 = vpop.f32.mrf.mxu0
        %698 = vdwg.mxu0
        %s699 = scalar_lea.vmem %s197, 128 [#allocation3]
        %v700 = vld [vmem:[%s699] sm:$0xf]
        %v701 = vld [vmem:[%s699 + $0x4] sm:$0xf]
        %v702 = vld [vmem:[%s699 + $0x8] sm:$0xf]
        %v703 = vld [vmem:[%s699 + $0xc] sm:$0xf]
        %v704 = vld [vmem:[%s699 + $0x10] sm:$0xf]
        %v705 = vld [vmem:[%s699 + $0x14] sm:$0xf]
        %v706 = vld [vmem:[%s699 + $0x18] sm:$0xf]
        %v707 = vld [vmem:[%s699 + $0x1c] sm:$0xf]
        %v708 = vld [vmem:[%s699 + $0x20] sm:$0xf]
        %v709 = vld [vmem:[%s699 + $0x24] sm:$0xf]
        %v710 = vld [vmem:[%s699 + $0x28] sm:$0xf]
        %v711 = vld [vmem:[%s699 + $0x2c] sm:$0xf]
        %v712 = vld [vmem:[%s699 + $0x30] sm:$0xf]
        %v713 = vld [vmem:[%s699 + $0x34] sm:$0xf]
        %v714 = vld [vmem:[%s699 + $0x38] sm:$0xf]
        %v715 = vld [vmem:[%s699 + $0x3c] sm:$0xf]
        %v716 = vpack.c.bf16 %v696, %v696
        %v717 = vlaneseq
        %v718 = vshrl.u32 %v717, 7
        %v719 = vsub.s32 0, %v718
        %v720 = vrot.slane %v252, %v719
        %v737 = vunpack.c.l.b16 %v700
        %v738 = vunpack.c.l.b16 %v701
        %v739 = vunpack.c.l.b16 %v702
        %v740 = vunpack.c.l.b16 %v703
        %v741 = vunpack.c.l.b16 %v704
        %v742 = vunpack.c.l.b16 %v705
        %v743 = vunpack.c.l.b16 %v706
        %v744 = vunpack.c.l.b16 %v707
        %v745 = vunpack.c.l.b16 %v708
        %v746 = vunpack.c.l.b16 %v709
        %v747 = vunpack.c.l.b16 %v710
        %v748 = vunpack.c.l.b16 %v711
        %v749 = vunpack.c.l.b16 %v712
        %v750 = vunpack.c.l.b16 %v713
        %v751 = vunpack.c.l.b16 %v714
        %v752 = vunpack.c.l.b16 %v715
        %v753 = vpack.c.b16 %v738, %v737
        %v754 = vpack.c.b16 %v740, %v739
        %v755 = vpack.c.b16 %v742, %v741
        %v756 = vpack.c.b16 %v744, %v743
        %v757 = vpack.c.b16 %v746, %v745
        %v758 = vpack.c.b16 %v748, %v747
        %v759 = vpack.c.b16 %v750, %v749
        %v760 = vpack.c.b16 %v752, %v751
        %769 = vmatprep.subr.bf16.mxu0 0
        %770 = vmatpush1.bf16.msra.mxu0 %v760
        %771 = vmatprep.subr.bf16.mxu0 0
        %772 = vmatpush1.bf16.msra.mxu0 %v759
        %773 = vmatprep.subr.bf16.mxu0 0
        %774 = vmatpush1.bf16.msra.mxu0 %v758
        %775 = vmatprep.subr.bf16.mxu0 0
        %776 = vmatpush1.bf16.msra.mxu0 %v757
        %777 = vmatprep.subr.bf16.mxu0 0
        %778 = vmatpush1.bf16.msra.mxu0 %v756
        %779 = vmatprep.subr.bf16.mxu0 0
        %780 = vmatpush1.bf16.msra.mxu0 %v755
        %781 = vmatprep.subr.bf16.mxu0 0
        %782 = vmatpush1.bf16.msra.mxu0 %v754
        %783 = vmatprep.subr.bf16.mxu0 0
        %784 = vmatpush1.bf16.msra.mxu0 %v753
        %785 = vmatprep.subr.bf16.mxu0 0
        %786 = vmatpush2.bf16.msra.mxu0 0
        %787 = vmatprep.subr.bf16.mxu0 0
        %788 = vmatpush2.bf16.msra.mxu0 0
        %789 = vmatprep.subr.bf16.mxu0 0
        %790 = vmatpush2.bf16.msra.mxu0 0
        %791 = vmatprep.subr.bf16.mxu0 0
        %792 = vmatpush2.bf16.msra.mxu0 0
        %793 = vmatprep.subr.bf16.mxu0 0
        %794 = vmatpush2.bf16.msra.mxu0 0
        %795 = vmatprep.subr.bf16.mxu0 0
        %796 = vmatpush2.bf16.msra.mxu0 0
        %797 = vmatprep.subr.bf16.mxu0 0
        %798 = vmatpush2.bf16.msra.mxu0 0
        %799 = vmatprep.subr.bf16.mxu0 0
        %800 = vmatpush2.bf16.msra.mxu0 0
        %801 = vmatprep.mubr.bf16.mxu0 0
        %802 = vmatmul.mubr.bf16.gmra.mxu0 %v716
        %v803 = vpop.f32.mrf.mxu0
        %v804 = vadd.f32 %v720, %v803
        %v805 = vpop.f32.mrf.mxu0
        %v806 = vpop.f32.mrf.mxu0
        %v807 = vpop.f32.mrf.mxu0
        %808 = vdwg.mxu0
        %v809 = vmax.f32 %v804, 0.0
        %v810 = vadd.f32 %v249, %v809
        %811 = vadd.xlane.f32.xlu0 %v810
        %v812 = vpop.xlane.xlu0 %811
        %v813 = vrcp.pop 128.0
        %v814 = vmul.f32 %v812, %v813
        %v815 = vsub.f32 %v810, %v814
        %v816 = vmul.f32 %v815, %v815
        %817 = vadd.xlane.f32.xlu0 %v816
        %v818 = vpop.xlane.xlu0 %817
        %v819 = vmul.f32 %v818, %v813
        %v820 = vadd.f32 %v819, 1e-05
        %v821 = vrsqrt.pop %v820
        %v822 = vmul.f32 %v815, %v821
        %v823 = vlaneseq
        %v824 = vshrl.u32 %v823, 7
        %v825 = vsub.s32 0, %v824
        %v826 = vrot.slane %v255, %v825
        %v827 = vmul.f32 %v822, %v826
        %v828 = vlaneseq
        %v829 = vshrl.u32 %v828, 7
        %v830 = vsub.s32 0, %v829
        %v831 = vrot.slane %v256, %v830
        %v832 = vadd.f32 %v827, %v831
        %s833 = scalar_lea.vmem %s197, 192 [#allocation3]
        %v834 = vld [vmem:[%s833] sm:$0xf]
        %v835 = vld [vmem:[%s833 + $0x4] sm:$0xf]
        %v836 = vld [vmem:[%s833 + $0x8] sm:$0xf]
        %v837 = vld [vmem:[%s833 + $0xc] sm:$0xf]
        %v838 = vld [vmem:[%s833 + $0x10] sm:$0xf]
        %v839 = vld [vmem:[%s833 + $0x14] sm:$0xf]
        %v840 = vld [vmem:[%s833 + $0x18] sm:$0xf]
        %v841 = vld [vmem:[%s833 + $0x1c] sm:$0xf]
        %v842 = vld [vmem:[%s833 + $0x20] sm:$0xf]
        %v843 = vld [vmem:[%s833 + $0x24] sm:$0xf]
        %v844 = vld [vmem:[%s833 + $0x28] sm:$0xf]
        %v845 = vld [vmem:[%s833 + $0x2c] sm:$0xf]
        %v846 = vld [vmem:[%s833 + $0x30] sm:$0xf]
        %v847 = vld [vmem:[%s833 + $0x34] sm:$0xf]
        %v848 = vld [vmem:[%s833 + $0x38] sm:$0xf]
        %v849 = vld [vmem:[%s833 + $0x3c] sm:$0xf]
        %v850 = vpack.c.bf16 %v832, %v832
        %v851 = vlaneseq
        %v852 = vshrl.u32 %v851, 7
        %v853 = vsub.s32 0, %v852
        %v854 = vrot.slane %v253, %v853
        %v871 = vunpack.c.l.b16 %v834
        %v872 = vunpack.c.l.b16 %v835
        %v873 = vunpack.c.l.b16 %v836
        %v874 = vunpack.c.l.b16 %v837
        %v875 = vunpack.c.l.b16 %v838
        %v876 = vunpack.c.l.b16 %v839
        %v877 = vunpack.c.l.b16 %v840
        %v878 = vunpack.c.l.b16 %v841
        %v879 = vunpack.c.l.b16 %v842
        %v880 = vunpack.c.l.b16 %v843
        %v881 = vunpack.c.l.b16 %v844
        %v882 = vunpack.c.l.b16 %v845
        %v883 = vunpack.c.l.b16 %v846
        %v884 = vunpack.c.l.b16 %v847
        %v885 = vunpack.c.l.b16 %v848
        %v886 = vunpack.c.l.b16 %v849
        %v887 = vpack.c.b16 %v872, %v871
        %v888 = vpack.c.b16 %v874, %v873
        %v889 = vpack.c.b16 %v876, %v875
        %v890 = vpack.c.b16 %v878, %v877
        %v891 = vpack.c.b16 %v880, %v879
        %v892 = vpack.c.b16 %v882, %v881
        %v893 = vpack.c.b16 %v884, %v883
        %v894 = vpack.c.b16 %v886, %v885
        %903 = vmatprep.subr.bf16.mxu0 0
        %904 = vmatpush1.bf16.msra.mxu0 %v894
        %905 = vmatprep.subr.bf16.mxu0 0
        %906 = vmatpush1.bf16.msra.mxu0 %v893
        %907 = vmatprep.subr.bf16.mxu0 0
        %908 = vmatpush1.bf16.msra.mxu0 %v892
        %909 = vmatprep.subr.bf16.mxu0 0
        %910 = vmatpush1.bf16.msra.mxu0 %v891
        %911 = vmatprep.subr.bf16.mxu0 0
        %912 = vmatpush1.bf16.msra.mxu0 %v890
        %913 = vmatprep.subr.bf16.mxu0 0
        %914 = vmatpush1.bf16.msra.mxu0 %v889
        %915 = vmatprep.subr.bf16.mxu0 0
        %916 = vmatpush1.bf16.msra.mxu0 %v888
        %917 = vmatprep.subr.bf16.mxu0 0
        %918 = vmatpush1.bf16.msra.mxu0 %v887
        %919 = vmatprep.subr.bf16.mxu0 0
        %920 = vmatpush2.bf16.msra.mxu0 0
        %921 = vmatprep.subr.bf16.mxu0 0
        %922 = vmatpush2.bf16.msra.mxu0 0
        %923 = vmatprep.subr.bf16.mxu0 0
        %924 = vmatpush2.bf16.msra.mxu0 0
        %925 = vmatprep.subr.bf16.mxu0 0
        %926 = vmatpush2.bf16.msra.mxu0 0
        %927 = vmatprep.subr.bf16.mxu0 0
        %928 = vmatpush2.bf16.msra.mxu0 0
        %929 = vmatprep.subr.bf16.mxu0 0
        %930 = vmatpush2.bf16.msra.mxu0 0
        %931 = vmatprep.subr.bf16.mxu0 0
        %932 = vmatpush2.bf16.msra.mxu0 0
        %933 = vmatprep.subr.bf16.mxu0 0
        %934 = vmatpush2.bf16.msra.mxu0 0
        %935 = vmatprep.mubr.bf16.mxu0 0
        %936 = vmatmul.mubr.bf16.gmra.mxu0 %v850
        %v937 = vpop.f32.mrf.mxu0
        %v938 = vadd.f32 %v854, %v937
        %v939 = vpop.f32.mrf.mxu0
        %v940 = vpop.f32.mrf.mxu0
        %v941 = vpop.f32.mrf.mxu0
        %942 = vdwg.mxu0
        %v943 = vmax.f32 %v938, 0.0
        %s944 = scalar_lea.vmem %s197, 256 [#allocation3]
        %v945 = vld [vmem:[%s944] sm:$0xf]
        %v946 = vld [vmem:[%s944 + $0x4] sm:$0xf]
        %v947 = vld [vmem:[%s944 + $0x8] sm:$0xf]
        %v948 = vld [vmem:[%s944 + $0xc] sm:$0xf]
        %v949 = vld [vmem:[%s944 + $0x10] sm:$0xf]
        %v950 = vld [vmem:[%s944 + $0x14] sm:$0xf]
        %v951 = vld [vmem:[%s944 + $0x18] sm:$0xf]
        %v952 = vld [vmem:[%s944 + $0x1c] sm:$0xf]
        %v953 = vld [vmem:[%s944 + $0x20] sm:$0xf]
        %v954 = vld [vmem:[%s944 + $0x24] sm:$0xf]
        %v955 = vld [vmem:[%s944 + $0x28] sm:$0xf]
        %v956 = vld [vmem:[%s944 + $0x2c] sm:$0xf]
        %v957 = vld [vmem:[%s944 + $0x30] sm:$0xf]
        %v958 = vld [vmem:[%s944 + $0x34] sm:$0xf]
        %v959 = vld [vmem:[%s944 + $0x38] sm:$0xf]
        %v960 = vld [vmem:[%s944 + $0x3c] sm:$0xf]
        %v961 = vpack.c.bf16 %v943, %v943
        %v978 = vunpack.c.l.b16 %v945
        %v979 = vunpack.c.l.b16 %v946
        %v980 = vunpack.c.l.b16 %v947
        %v981 = vunpack.c.l.b16 %v948
        %v982 = vunpack.c.l.b16 %v949
        %v983 = vunpack.c.l.b16 %v950
        %v984 = vunpack.c.l.b16 %v951
        %v985 = vunpack.c.l.b16 %v952
        %v986 = vunpack.c.l.b16 %v953
        %v987 = vunpack.c.l.b16 %v954
        %v988 = vunpack.c.l.b16 %v955
        %v989 = vunpack.c.l.b16 %v956
        %v990 = vunpack.c.l.b16 %v957
        %v991 = vunpack.c.l.b16 %v958
        %v992 = vunpack.c.l.b16 %v959
        %v993 = vunpack.c.l.b16 %v960
        %v994 = vpack.c.b16 %v979, %v978
        %v995 = vpack.c.b16 %v981, %v980
        %v996 = vpack.c.b16 %v983, %v982
        %v997 = vpack.c.b16 %v985, %v984
        %v998 = vpack.c.b16 %v987, %v986
        %v999 = vpack.c.b16 %v989, %v988
        %v1000 = vpack.c.b16 %v991, %v990
        %v1001 = vpack.c.b16 %v993, %v992
        %1010 = vmatprep.subr.bf16.mxu0 0
        %1011 = vmatpush1.bf16.msra.mxu0 %v1001
        %1012 = vmatprep.subr.bf16.mxu0 0
        %1013 = vmatpush1.bf16.msra.mxu0 %v1000
        %1014 = vmatprep.subr.bf16.mxu0 0
        %1015 = vmatpush1.bf16.msra.mxu0 %v999
        %1016 = vmatprep.subr.bf16.mxu0 0
        %1017 = vmatpush1.bf16.msra.mxu0 %v998
        %1018 = vmatprep.subr.bf16.mxu0 0
        %1019 = vmatpush1.bf16.msra.mxu0 %v997
        %1020 = vmatprep.subr.bf16.mxu0 0
        %1021 = vmatpush1.bf16.msra.mxu0 %v996
        %1022 = vmatprep.subr.bf16.mxu0 0
        %1023 = vmatpush1.bf16.msra.mxu0 %v995
        %1024 = vmatprep.subr.bf16.mxu0 0
        %1025 = vmatpush1.bf16.msra.mxu0 %v994
        %1026 = vmatprep.subr.bf16.mxu0 0
        %1027 = vmatpush2.bf16.msra.mxu0 0
        %1028 = vmatprep.subr.bf16.mxu0 0
        %1029 = vmatpush2.bf16.msra.mxu0 0
        %1030 = vmatprep.subr.bf16.mxu0 0
        %1031 = vmatpush2.bf16.msra.mxu0 0
        %1032 = vmatprep.subr.bf16.mxu0 0
        %1033 = vmatpush2.bf16.msra.mxu0 0
        %1034 = vmatprep.subr.bf16.mxu0 0
        %1035 = vmatpush2.bf16.msra.mxu0 0
        %1036 = vmatprep.subr.bf16.mxu0 0
        %1037 = vmatpush2.bf16.msra.mxu0 0
        %1038 = vmatprep.subr.bf16.mxu0 0
        %1039 = vmatpush2.bf16.msra.mxu0 0
        %1040 = vmatprep.subr.bf16.mxu0 0
        %1041 = vmatpush2.bf16.msra.mxu0 0
        %1042 = vmatprep.mubr.bf16.mxu0 0
        %1043 = vmatmul.mubr.bf16.gmra.mxu0 %v961
        %v1044 = vpop.f32.mrf.mxu0
        %v1045 = vadd.f32 0.0, %v1044
        %v1046 = vpop.f32.mrf.mxu0
        %v1047 = vpop.f32.mrf.mxu0
        %v1048 = vpop.f32.mrf.mxu0
        %1049 = vdwg.mxu0
        %v1050 = vadd.f32 %v832, %v1045
        %v1051 = vlaneseq
        %v1052 = vshrl.u32 %v1051, 7
        %v1053 = vsub.s32 0, %v1052
        %v1054 = vrot.slane %v254, %v1053
        %v1055 = vadd.f32 %v1050, %v1054
        %1056 = vadd.xlane.f32.xlu0 %v1055
        %v1057 = vpop.xlane.xlu0 %1056
        %v1058 = vmul.f32 %v1057, %v813
        %v1059 = vsub.f32 %v1055, %v1058
        %v1060 = vmul.f32 %v1059, %v1059
        %1061 = vadd.xlane.f32.xlu0 %v1060
        %v1062 = vpop.xlane.xlu0 %1061
        %v1063 = vmul.f32 %v1062, %v813
        %v1064 = vadd.f32 %v1063, 1e-05
        %v1065 = vrsqrt.pop %v1064
        %v1066 = vmul.f32 %v1059, %v1065
        %v1067 = vlaneseq
        %v1068 = vshrl.u32 %v1067, 7
        %v1069 = vsub.s32 0, %v1068
        %v1070 = vrot.slane %v257, %v1069
        %v1071 = vmul.f32 %v1066, %v1070
        %v1072 = vlaneseq
        %v1073 = vshrl.u32 %v1072, 7
        %v1074 = vsub.s32 0, %v1073
        %v1075 = vrot.slane %v258, %v1074
        %v1076 = vadd.f32 %v1071, %v1075
        %s1077 = scalar_select %p239, 1, 0
        %v1078 = vstv %s1077
        %vm1079 = vcmp.eq.s32.totalorder %v1078, 1
        %v1080 = vsel %vm1079, %v1076, %v1055
        %1081 = vst [vmem:[%s248] sm:$0xff] %v1080
        %1082 = vst [vmem:[%s228] sm:$0xff] %v1080
        %s1083 = sand.u32 %s118, 1
        %s1084 = scalar_lea.sflag [#allocation5], %s1083
        %s1085 = sand.u32 %s118, 1
        %s1086 = smul.addr %s1085, 8
        %s1087 = scalar_lea.vmem [#allocation6], %s1086
        // Predicated region
        $region41: #{graph_ed_forward.1} parent=31 // pred_check
          %p1088 = pneg %p128
        $region42: #{graph_ed_forward.1} parent=31 // pred_check_branch
          %1090 = sbr.rel (%p1088) target = $region44
        $region43: #{graph_ed_forward.1} parent=31 // pred_region
          %s1092 = ssub.s32 128, 128
          %1093 = vsyncadd %s1084, %s1092
          %s1094 = smul.addr %s25, 128
          %s1095 = scalar_lea.hbm %s3, %s1094
          %s1097 = sshll.u32 %s1087, 4
          %s1098 = int_to_ptr.vmem [resolvable:$true] %s1097
          %1100 = dma.vmem_to_hbm [thread:$0]  %s1098, 128, %s1095, %s1084
        $region44: #{graph_ed_forward.1} parent=31 // pred_fallthru
          _
      $region32: #{graph_ed_forward.1} parent=5 // pred_fallthru
        _
      %p1101 = scmp.le.s32.totalorder 2, %s15
      // Predicated region
      $region45: #{graph_ed_forward.1} parent=5 // pred_check
        %p1102 = pneg %p1101
      $region46: #{graph_ed_forward.1} parent=5 // pred_check_branch
        %1104 = sbr.rel (%p1102) target = $region48
      $region47: #{graph_ed_forward.1} parent=5 // pred_region
        %s1105 = ssub.s32 %s15, 2
        // Predicated region
        $region49: #{graph_ed_forward.1} parent=47 // pred_check
          %p1106 = pneg %p134
        $region50: #{graph_ed_forward.1} parent=47 // pred_check_branch
          %1108 = sbr.rel (%p1106) target = $region52
        $region51: #{graph_ed_forward.1} parent=47 // pred_region
          %s1109 = sand.u32 %s119, 1
          %s1110 = scalar_lea.sflag [#allocation5], %s1109
          %s1111 = sand.u32 %s119, 1
          %s1112 = smul.addr %s1111, 8
          %s1113 = scalar_lea.vmem [#allocation6], %s1112
          %1114 = dma.done %s1110, 128
        $region52: #{graph_ed_forward.1} parent=47 // pred_fallthru
          _
      $region48: #{graph_ed_forward.1} parent=5 // pred_fallthru
        _
    $region6: #{graph_ed_forward.1} parent=1 // loop_footer
      %s19 = sadd.s32 1, %s15
    $region7: #{graph_ed_forward.1} parent=1 // loop_footer_branch
      %14 = sbr.rel target = $region3
    $region8: #{graph_ed_forward.1} parent=1 // loop_exit
      _
    %1115 = vsyncpa [#allocation4], 1
    %s1116 = scalar_lea.sflag [#allocation4], 1
    %1117 = vsyncpa %s1116, 1
    %1118 = vsyncpa [#allocation5], 1
    %s1119 = scalar_lea.sflag [#allocation5], 1
    %1120 = vsyncpa %s1119, 1

</llo_original>
